<compile_context>
chip_gen: v6e
topology: v6e:2x2x1
jax: 0.10.0
libtpu: 0.0.40
codegen_flags: <defaults>
</compile_context>

<pallas_src>
import functools

import jax
import jax.numpy as jnp
from jax.experimental import pallas as pl
from jax.experimental.pallas import tpu as pltpu


def _round_up(v, m):
    return ((v + m - 1) // m) * m


def _fused_mlp_kernel(*refs, n_layers, negative_slope):
    """Fused multi-layer Linear (+ LeakyReLU on hidden layers).

    refs layout: (x_ref, w0, b0, w1, b1, ..., w_{n-1}, b_{n-1}, o_ref)
      x_ref: (tb, in_dim)        VMEM tile (pipelined over the batch grid)
      w_i:   (in_i, out_i)       VMEM whole-array resident (pre-transposed)
      b_i:   (1, out_i)          VMEM whole-array resident
      o_ref: (tb, out_dim_pad)   VMEM tile (lane-dense, out_dim_pad % 128 == 0)
    """
    x_ref = refs[0]
    o_ref = refs[-1]
    wb = refs[1:-1]

    y = x_ref[...]
    for i in range(n_layers):
        w = wb[2 * i][...]
        b = wb[2 * i + 1][...]
        # MXU inputs in the weight dtype (bf16 if so configured), f32 accumulate.
        y = jnp.dot(y.astype(w.dtype), w, preferred_element_type=jnp.float32)
        y = y + b.astype(jnp.float32)
        if i < n_layers - 1:
            # LeakyReLU(slope) for 0 < slope < 1: max(y, slope*y) — single VALU op.
            y = jnp.maximum(y, negative_slope * y)
    o_ref[...] = y.astype(o_ref.dtype)


def fused_mlp_pallas(x, weights, biases, *, negative_slope=0.2, tile_b=4096):
    """x: (B, in_dim); weights[i]: (in_i, out_i); biases[i]: (1, out_i).

    The last layer's out dim is expected to already be lane-dense (multiple of
    128, zero-padded); the caller slices the padding off.
    """
    B, in_dim = x.shape
    n_layers = len(weights)
    out_dim_p = weights[-1].shape[1]

    # --- batch tiling --------------------------------------------------------
    # Single block for modest batches; otherwise large tiles (multiple of 8
    # sublanes) amortizing the ~0.35 us per-grid-step overhead, capped so the
    # grid has >= 2 steps (keeps both v7x TensorCores busy via "parallel").
    if B <= 256:
        tb = B
    else:
        tb = min(tile_b, _round_up(pl.cdiv(B, 2), 8))
    grid = (pl.cdiv(B, tb),)
    # No jnp.pad(x): Pallas masks the partial trailing block itself.

    resident = pl.BlockSpec(memory_space=pltpu.MemorySpace.VMEM)  # whole array, no double-buffer
    in_specs = [pl.BlockSpec((tb, in_dim), lambda i: (i, 0))]
    flat_wb = []
    for w, b in zip(weights, biases):
        in_specs += [resident, resident]
        flat_wb += [w, b]

    flops = 2 * B * sum(int(w.shape[0]) * int(w.shape[1]) for w in weights)
    bytes_accessed = int(
        x.size * x.dtype.itemsize
        + sum(int(w.size) * w.dtype.itemsize for w in weights)
        + sum(int(b.size) * b.dtype.itemsize for b in biases)
        + B * out_dim_p * x.dtype.itemsize
    )

    kernel = functools.partial(
        _fused_mlp_kernel, n_layers=n_layers, negative_slope=negative_slope
    )

    return pl.pallas_call(
        kernel,
        out_shape=jax.ShapeDtypeStruct((B, out_dim_p), x.dtype),
        grid=grid,
        in_specs=in_specs,
        out_specs=pl.BlockSpec((tb, out_dim_p), lambda i: (i, 0)),
        compiler_params=pltpu.CompilerParams(
            dimension_semantics=("parallel",),
        ),
        cost_estimate=pl.CostEstimate(
            flops=flops, transcendentals=0, bytes_accessed=bytes_accessed
        ),
    )(x, *flat_wb)


def _mlp_jnp(y, weights, biases, negative_slope):
    """Plain-jnp path: reference for tests AND tiny-batch fallback (XLA fuses it)."""
    out_dtype = y.dtype
    n = len(weights)
    for i, (w, b) in enumerate(zip(weights, biases)):
        y = jnp.dot(y.astype(w.dtype), w, preferred_element_type=jnp.float32)
        y = y + b.astype(jnp.float32)
        if i < n - 1:
            y = jnp.maximum(y, negative_slope * y)
    return y.astype(out_dtype)


class MLPPallas:
    """JAX/Pallas equivalent of the PyTorch MLP module.

    dims = cfg.MODEL.MOTION_DECODER.MLP_DIM; hidden blocks use LeakyReLU(0.2),
    final block has no activation; norm='none', no dropout in this config.
    Weights are stored pre-transposed (in, out), biases as (1, out), and the
    final layer's out-features zero-padded to a multiple of 128 lanes (the
    wrapper slices the padding off) so the output HBM store is unmasked.
    """

    LANE = 128
    MIN_PALLAS_BATCH = 64  # below this, launch overhead dwarfs the work

    def __init__(self, dims, out_dim, key, param_dtype=jnp.float32):
        self.out_dim = out_dim
        self.out_dim_p = max(self.LANE, _round_up(out_dim, self.LANE))
        layer_dims = list(dims) + [out_dim]
        self.weights = []  # (in_i, out_i)
        self.biases = []   # (1, out_i)
        # Deterministic synthetic init (not a checkpoint load).
        for i in range(len(layer_dims) - 1):
            key, kw, kb = jax.random.split(key, 3)
            fan_in, fan_out = layer_dims[i], layer_dims[i + 1]
            # PyTorch nn.Linear stores (out, in); transpose once at init so the
            # forward pass has zero layout glue.
            w = (jax.random.normal(kw, (fan_out, fan_in), jnp.float32) * 0.05).T
            b = jax.random.normal(kb, (1, fan_out), jnp.float32) * 0.05
            if i == len(layer_dims) - 2 and fan_out != self.out_dim_p:
                pad = self.out_dim_p - fan_out
                w = jnp.pad(w, ((0, 0), (0, pad)))  # zero cols -> zero padded outputs
                b = jnp.pad(b, ((0, 0), (0, pad)))
            self.weights.append(w.astype(param_dtype))
            self.biases.append(b.astype(param_dtype))

    def __call__(self, x, *, force_pallas=False):
        B = x.shape[0]
        y = x.reshape(B, -1)  # x.view(x.size(0), -1)
        if force_pallas or B >= self.MIN_PALLAS_BATCH:
            out = fused_mlp_pallas(y, self.weights, self.biases, negative_slope=0.2)
        else:
            out = _mlp_jnp(y, self.weights, self.biases, 0.2)
        return out[:, : self.out_dim]


if __name__ == "__main__":
    key = jax.random.PRNGKey(0)
    key, kx1, kx2, kp = jax.random.split(key, 4)

    # cfg.MODEL.MOTION_DECODER.MLP_DIM = [64, 32, 32]; out_dim = 16
    dims = [64, 32, 32]
    out_dim = 16
    mlp = MLPPallas(dims, out_dim, kp)

    # 1) Small-shape test: input (2, 4, 4, 4) flattened to (2, 64).  Force the
    #    Pallas path so the kernel itself is exercised even at tiny B.
    x_small = jax.random.normal(kx1, (2, 4, 4, 4), jnp.float32)
    y_small = jax.block_until_ready(mlp(x_small, force_pallas=True))
    ref_small = _mlp_jnp(x_small.reshape(2, -1), mlp.weights, mlp.biases, 0.2)[:, :out_dim]
    assert y_small.shape == (2, out_dim), y_small.shape
    assert jnp.allclose(y_small, ref_small, atol=1e-5, rtol=1e-5), "small-batch mismatch"

    # 2) Larger non-multiple batch: exercises the >=2-step grid, masked trailing
    #    block (no jnp.pad of x), and the lane-dense 128-wide output store.
    x_big = jax.random.normal(kx2, (1000, 64), jnp.float32)
    y_big = jax.block_until_ready(mlp(x_big))
    ref_big = _mlp_jnp(x_big, mlp.weights, mlp.biases, 0.2)[:, :out_dim]
    assert y_big.shape == (1000, out_dim), y_big.shape
    assert jnp.allclose(y_big, ref_big, atol=1e-4, rtol=1e-4), "large-batch mismatch"

    print("KERNEL_OK")
</pallas_src>

<mosaic_0001>
module attributes {stable_mosaic.version = 11 : i64} {
  func.func @_fused_mlp_kernel(%arg0: i32, %arg1: memref<2x64xf32, #tpu.memory_space<vmem>>, %arg2: memref<64x32xf32, #tpu.memory_space<vmem>>, %arg3: memref<1x32xf32, #tpu.memory_space<vmem>>, %arg4: memref<32x32xf32, #tpu.memory_space<vmem>>, %arg5: memref<1x32xf32, #tpu.memory_space<vmem>>, %arg6: memref<32x128xf32, #tpu.memory_space<vmem>>, %arg7: memref<1x128xf32, #tpu.memory_space<vmem>>, %arg8: memref<2x128xf32, #tpu.memory_space<vmem>>) attributes {dimension_semantics = [#tpu.dimension_semantics<parallel>], iteration_bounds = array<i64: 1>, scalar_prefetch = 0 : i64, scratch_operands = 0 : i64, tpu.core_type = #tpu.core_type<tc>, window_params = [{transform_indices = @transform_0, window_bounds = array<i64: 2, 64>}, {pipeline_mode = #tpu.pipeline_mode<synchronous>, transform_indices = @transform_1, window_bounds = array<i64: 64, 32>}, {pipeline_mode = #tpu.pipeline_mode<synchronous>, transform_indices = @transform_2, window_bounds = array<i64: 1, 32>}, {pipeline_mode = #tpu.pipeline_mode<synchronous>, transform_indices = @transform_3, window_bounds = array<i64: 32, 32>}, {pipeline_mode = #tpu.pipeline_mode<synchronous>, transform_indices = @transform_4, window_bounds = array<i64: 1, 32>}, {pipeline_mode = #tpu.pipeline_mode<synchronous>, transform_indices = @transform_5, window_bounds = array<i64: 32, 128>}, {pipeline_mode = #tpu.pipeline_mode<synchronous>, transform_indices = @transform_6, window_bounds = array<i64: 1, 128>}, {transform_indices = @transform_7, window_bounds = array<i64: 2, 128>}]} {
    %c0 = arith.constant 0 : index
    %c0_0 = arith.constant 0 : index
    %0 = vector.load %arg1[%c0, %c0_0] : memref<2x64xf32, #tpu.memory_space<vmem>>, vector<2x64xf32>
    %c0_1 = arith.constant 0 : index
    %c0_2 = arith.constant 0 : index
    %1 = vector.load %arg2[%c0_1, %c0_2] : memref<64x32xf32, #tpu.memory_space<vmem>>, vector<64x32xf32>
    %c0_3 = arith.constant 0 : index
    %c0_4 = arith.constant 0 : index
    %2 = vector.load %arg3[%c0_3, %c0_4] : memref<1x32xf32, #tpu.memory_space<vmem>>, vector<1x32xf32>
    %cst = arith.constant dense<0.000000e+00> : vector<2x32xf32>
    %3 = tpu.matmul %0, %1, %cst {dimension_numbers = #tpu.dot_dimension_numbers<[1], [0], [0], [1], [0, 0, 1, 1], [], []>} : vector<2x64xf32>, vector<64x32xf32>, vector<2x32xf32> -> vector<2x32xf32>
    %4 = vector.broadcast %2 : vector<1x32xf32> to vector<2x32xf32>
    %5 = arith.addf %3, %4 : vector<2x32xf32>
    %cst_5 = arith.constant 2.000000e-01 : f32
    %6 = vector.broadcast %cst_5 : f32 to vector<2x32xf32>
    %7 = arith.mulf %6, %5 : vector<2x32xf32>
    %8 = arith.maximumf %5, %7 : vector<2x32xf32>
    %c0_6 = arith.constant 0 : index
    %c0_7 = arith.constant 0 : index
    %9 = vector.load %arg4[%c0_6, %c0_7] : memref<32x32xf32, #tpu.memory_space<vmem>>, vector<32x32xf32>
    %c0_8 = arith.constant 0 : index
    %c0_9 = arith.constant 0 : index
    %10 = vector.load %arg5[%c0_8, %c0_9] : memref<1x32xf32, #tpu.memory_space<vmem>>, vector<1x32xf32>
    %cst_10 = arith.constant dense<0.000000e+00> : vector<2x32xf32>
    %11 = tpu.matmul %8, %9, %cst_10 {dimension_numbers = #tpu.dot_dimension_numbers<[1], [0], [0], [1], [0, 0, 1, 1], [], []>} : vector<2x32xf32>, vector<32x32xf32>, vector<2x32xf32> -> vector<2x32xf32>
    %12 = vector.broadcast %10 : vector<1x32xf32> to vector<2x32xf32>
    %13 = arith.addf %11, %12 : vector<2x32xf32>
    %cst_11 = arith.constant 2.000000e-01 : f32
    %14 = vector.broadcast %cst_11 : f32 to vector<2x32xf32>
    %15 = arith.mulf %14, %13 : vector<2x32xf32>
    %16 = arith.maximumf %13, %15 : vector<2x32xf32>
    %c0_12 = arith.constant 0 : index
    %c0_13 = arith.constant 0 : index
    %17 = vector.load %arg6[%c0_12, %c0_13] : memref<32x128xf32, #tpu.memory_space<vmem>>, vector<32x128xf32>
    %c0_14 = arith.constant 0 : index
    %c0_15 = arith.constant 0 : index
    %18 = vector.load %arg7[%c0_14, %c0_15] : memref<1x128xf32, #tpu.memory_space<vmem>>, vector<1x128xf32>
    %cst_16 = arith.constant dense<0.000000e+00> : vector<2x128xf32>
    %19 = tpu.matmul %16, %17, %cst_16 {dimension_numbers = #tpu.dot_dimension_numbers<[1], [0], [0], [1], [0, 0, 1, 1], [], []>} : vector<2x32xf32>, vector<32x128xf32>, vector<2x128xf32> -> vector<2x128xf32>
    %20 = vector.broadcast %18 : vector<1x128xf32> to vector<2x128xf32>
    %21 = arith.addf %19, %20 : vector<2x128xf32>
    %c0_17 = arith.constant 0 : index
    %c0_18 = arith.constant 0 : index
    %22 = vector.load %arg8[%c0_17, %c0_18] : memref<2x128xf32, #tpu.memory_space<vmem>>, vector<2x128xf32>
    tpu.vector_store %arg8[%c0_17, %c0_18], %21 {strides = array<i32>} : memref<2x128xf32, #tpu.memory_space<vmem>>, vector<2x128xf32>,
    return
  }
  func.func @transform_0(%arg0: i32) -> (i32, i32) {
    %c0_i32 = arith.constant 0 : i32
    %c0_i32_0 = arith.constant 0 : i32
    return %arg0, %c0_i32 : i32, i32
  }
  func.func @transform_1(%arg0: i32) -> (i32, i32) {
    %c0_i32 = arith.constant 0 : i32
    %c0_i32_0 = arith.constant 0 : i32
    %c0_i32_1 = arith.constant 0 : i32
    return %c0_i32, %c0_i32_0 : i32, i32
  }
  func.func @transform_2(%arg0: i32) -> (i32, i32) {
    %c0_i32 = arith.constant 0 : i32
    %c0_i32_0 = arith.constant 0 : i32
    %c0_i32_1 = arith.constant 0 : i32
    return %c0_i32, %c0_i32_0 : i32, i32
  }
  func.func @transform_3(%arg0: i32) -> (i32, i32) {
    %c0_i32 = arith.constant 0 : i32
    %c0_i32_0 = arith.constant 0 : i32
    %c0_i32_1 = arith.constant 0 : i32
    return %c0_i32, %c0_i32_0 : i32, i32
  }
  func.func @transform_4(%arg0: i32) -> (i32, i32) {
    %c0_i32 = arith.constant 0 : i32
    %c0_i32_0 = arith.constant 0 : i32
    %c0_i32_1 = arith.constant 0 : i32
    return %c0_i32, %c0_i32_0 : i32, i32
  }
  func.func @transform_5(%arg0: i32) -> (i32, i32) {
    %c0_i32 = arith.constant 0 : i32
    %c0_i32_0 = arith.constant 0 : i32
    %c0_i32_1 = arith.constant 0 : i32
    return %c0_i32, %c0_i32_0 : i32, i32
  }
  func.func @transform_6(%arg0: i32) -> (i32, i32) {
    %c0_i32 = arith.constant 0 : i32
    %c0_i32_0 = arith.constant 0 : i32
    %c0_i32_1 = arith.constant 0 : i32
    return %c0_i32, %c0_i32_0 : i32, i32
  }
  func.func @transform_7(%arg0: i32) -> (i32, i32) {
    %c0_i32 = arith.constant 0 : i32
    %c0_i32_0 = arith.constant 0 : i32
    return %arg0, %c0_i32 : i32, i32
  }
}

</mosaic_0001>

<llo_original>
// kernel: tpu_custom_call.1
$region0: #{tpu_custom_call.1}
  #allocation0 [shape = 'u32[]', space=smem, size = 0x4, offset = 0x4, fixed_abs, tag = 'smem constant byte address 0x4 - core index']
  #allocation1 [shape = 'u32[144,128]{1,0:T(1,128)}', space=vmem, size = 0x12000, scoped, tag = 'internal scratch']
  %s0 = inlined_call_operand.vmem [shape: f32[2,64], index: 0, kind: input, shape index: {}]
  %s1 = inlined_call_operand.vmem [shape: f32[64,32], index: 1, kind: input, shape index: {}]
  %s2 = inlined_call_operand.vmem [shape: f32[1,32], index: 2, kind: input, shape index: {}]
  %s3 = inlined_call_operand.vmem [shape: f32[32,32], index: 3, kind: input, shape index: {}]
  %s4 = inlined_call_operand.vmem [shape: f32[1,32], index: 4, kind: input, shape index: {}]
  %s5 = inlined_call_operand.vmem [shape: f32[32,128], index: 5, kind: input, shape index: {}]
  %s6 = inlined_call_operand.vmem [shape: f32[1,128], index: 6, kind: input, shape index: {}]
  %s7 = inlined_call_operand.hbm [shape: f32[2,128], index: 7, kind: output, shape index: {}]
  %s8 = sld [smem:[#allocation0]]
  $region38: #{tpu_custom_call.1} parent=0
    _
  %s10 = ssub.s32 1, %s8
  %s11 = scalar_select 0, %s10, %s8
  $region1: #{tpu_custom_call.1} parent=0
    #allocation2 [shape = 'u8[1024]{0}', space=vmem, size = 0x400, scoped, tag = 'output window, operand 0, single buffered']
    #allocation3 [shape = 's32[1]{0}', space=sflag, size = 0x4, scoped, tag = 'scoped memory for tpu_custom_call.1']
    %12 = vsyncpa [#allocation3], 0
    // Predicated region
    $region2: #{tpu_custom_call.1} parent=1 // pred_check
      _
    $region3: #{tpu_custom_call.1} parent=1 // pred_check_branch
      %14 = sbr.rel (0) target = $region5
    $region4: #{tpu_custom_call.1} parent=1 // pred_region
      _
    $region5: #{tpu_custom_call.1} parent=1 // pred_fallthru
      _
    // Predicated region
    $region6: #{tpu_custom_call.1} parent=1 // pred_check
      _
    $region7: #{tpu_custom_call.1} parent=1 // pred_check_branch
      %16 = sbr.rel (0) target = $region9
    $region8: #{tpu_custom_call.1} parent=1 // pred_region
      _
    $region9: #{tpu_custom_call.1} parent=1 // pred_fallthru
      _
    // Predicated region
    $region10: #{tpu_custom_call.1} parent=1 // pred_check
      _
    $region11: #{tpu_custom_call.1} parent=1 // pred_check_branch
      %18 = sbr.rel (0) target = $region13
    $region12: #{tpu_custom_call.1} parent=1 // pred_region
      _
    $region13: #{tpu_custom_call.1} parent=1 // pred_fallthru
      _
    // Predicated region
    $region14: #{tpu_custom_call.1} parent=1 // pred_check
      _
    $region15: #{tpu_custom_call.1} parent=1 // pred_check_branch
      %20 = sbr.rel (0) target = $region17
    $region16: #{tpu_custom_call.1} parent=1 // pred_region
      _
    $region17: #{tpu_custom_call.1} parent=1 // pred_fallthru
      _
    // Predicated region
    $region18: #{tpu_custom_call.1} parent=1 // pred_check
      _
    $region19: #{tpu_custom_call.1} parent=1 // pred_check_branch
      %22 = sbr.rel (0) target = $region21
    $region20: #{tpu_custom_call.1} parent=1 // pred_region
      _
    $region21: #{tpu_custom_call.1} parent=1 // pred_fallthru
      _
    // Predicated region
    $region22: #{tpu_custom_call.1} parent=1 // pred_check
      _
    $region23: #{tpu_custom_call.1} parent=1 // pred_check_branch
      %24 = sbr.rel (0) target = $region25
    $region24: #{tpu_custom_call.1} parent=1 // pred_region
      _
    $region25: #{tpu_custom_call.1} parent=1 // pred_fallthru
      _
    // Predicated region
    $region26: #{tpu_custom_call.1} parent=1 // pred_check
      _
    $region27: #{tpu_custom_call.1} parent=1 // pred_check_branch
      %26 = sbr.rel (0) target = $region29
    $region28: #{tpu_custom_call.1} parent=1 // pred_region
      _
    $region29: #{tpu_custom_call.1} parent=1 // pred_fallthru
      _
    %v27 = vld [vmem:[%s0] sm:$0x3]
    %v28 = vld [vmem:[%s1] sm:$0xff]
    %v29 = vld [vmem:[%s1 + $0x8] sm:$0xff]
    %v30 = vld [vmem:[%s1 + $0x10] sm:$0xff]
    %v31 = vld [vmem:[%s1 + $0x18] sm:$0xff]
    %v32 = vld [vmem:[%s1 + $0x20] sm:$0xff]
    %v33 = vld [vmem:[%s1 + $0x28] sm:$0xff]
    %v34 = vld [vmem:[%s1 + $0x30] sm:$0xff]
    %v35 = vld [vmem:[%s1 + $0x38] sm:$0xff]
    %v36 = vld [vmem:[%s2] sm:$0x1]
    %v38 = vlaneseq
    %v39 = vshrl.u32 %v38, 7
    %v40 = vsub.s32 0, %v39
    %v41 = vrot.slane %v36, %v40
    %vm43 = vcmask 523264
    %v45 = vsel %vm43, %v27, 0
    %47 = vmatprep.subr.mxu0 0.0
    %48 = vmatpush1.msra.mxu0 0.0
    %49 = vmatprep.subr.mxu0 0.0
    %50 = vmatpush1.msra.mxu0 0.0
    %51 = vmatprep.subr.mxu0 0.0
    %52 = vmatpush1.msra.mxu0 0.0
    %53 = vmatprep.subr.mxu0 0.0
    %54 = vmatpush1.msra.mxu0 0.0
    %55 = vmatprep.subr.mxu0 0.0
    %56 = vmatpush1.msra.mxu0 0.0
    %57 = vmatprep.subr.mxu0 0.0
    %58 = vmatpush1.msra.mxu0 0.0
    %59 = vmatprep.subr.mxu0 0.0
    %60 = vmatpush1.msra.mxu0 0.0
    %61 = vmatprep.subr.mxu0 0.0
    %62 = vmatpush1.msra.mxu0 0.0
    %63 = vmatprep.subr.mxu0 0.0
    %64 = vmatpush1.msra.mxu0 %v35
    %65 = vmatprep.subr.mxu0 0.0
    %66 = vmatpush1.msra.mxu0 %v34
    %67 = vmatprep.subr.mxu0 0.0
    %68 = vmatpush1.msra.mxu0 %v33
    %69 = vmatprep.subr.mxu0 0.0
    %70 = vmatpush1.msra.mxu0 %v32
    %71 = vmatprep.subr.mxu0 0.0
    %72 = vmatpush1.msra.mxu0 %v31
    %73 = vmatprep.subr.mxu0 0.0
    %74 = vmatpush1.msra.mxu0 %v30
    %75 = vmatprep.subr.mxu0 0.0
    %76 = vmatpush1.msra.mxu0 %v29
    %77 = vmatprep.subr.mxu0 0.0
    %78 = vmatpush1.msra.mxu0 %v28
    %79 = vmatprep.subr.mxu0 0.0
    %80 = vmatpush2.msra.mxu0 0.0
    %81 = vmatprep.subr.mxu0 0.0
    %82 = vmatpush2.msra.mxu0 0.0
    %83 = vmatprep.subr.mxu0 0.0
    %84 = vmatpush2.msra.mxu0 0.0
    %85 = vmatprep.subr.mxu0 0.0
    %86 = vmatpush2.msra.mxu0 0.0
    %87 = vmatprep.subr.mxu0 0.0
    %88 = vmatpush2.msra.mxu0 0.0
    %89 = vmatprep.subr.mxu0 0.0
    %90 = vmatpush2.msra.mxu0 0.0
    %91 = vmatprep.subr.mxu0 0.0
    %92 = vmatpush2.msra.mxu0 0.0
    %93 = vmatprep.subr.mxu0 0.0
    %94 = vmatpush2.msra.mxu0 0.0
    %95 = vmatprep.subr.mxu0 0.0
    %96 = vmatpush2.msra.mxu0 0.0
    %97 = vmatprep.subr.mxu0 0.0
    %98 = vmatpush2.msra.mxu0 0.0
    %99 = vmatprep.subr.mxu0 0.0
    %100 = vmatpush2.msra.mxu0 0.0
    %101 = vmatprep.subr.mxu0 0.0
    %102 = vmatpush2.msra.mxu0 0.0
    %103 = vmatprep.subr.mxu0 0.0
    %104 = vmatpush2.msra.mxu0 0.0
    %105 = vmatprep.subr.mxu0 0.0
    %106 = vmatpush2.msra.mxu0 0.0
    %107 = vmatprep.subr.mxu0 0.0
    %108 = vmatpush2.msra.mxu0 0.0
    %109 = vmatprep.subr.mxu0 0.0
    %110 = vmatpush2.msra.mxu0 0.0
    %111 = vmatprep.mubr.f32.mxu0 0.0
    %112 = vmatmul.mubr.f32.gmra.mxu0 %v45
    %v113 = vpop.f32.mrf.mxu0
    %v114 = vadd.f32 %v41, %v113
    %v115 = vpop.f32.mrf.mxu0
    %116 = vdwg.mxu0
    %v117 = vmul.f32 %v114, 0.2
    %v118 = vmax.f32 %v114, %v117
    %v119 = vld [vmem:[%s3] sm:$0xff]
    %v120 = vld [vmem:[%s3 + $0x8] sm:$0xff]
    %v121 = vld [vmem:[%s3 + $0x10] sm:$0xff]
    %v122 = vld [vmem:[%s3 + $0x18] sm:$0xff]
    %v123 = vld [vmem:[%s4] sm:$0x1]
    %v125 = vlaneseq
    %v126 = vshrl.u32 %v125, 7
    %v127 = vsub.s32 0, %v126
    %v128 = vrot.slane %v123, %v127
    %vm130 = vcmask 261120
    %v132 = vsel %vm130, %v118, 0
    %134 = vmatprep.subr.mxu0 0.0
    %135 = vmatpush1.msra.mxu0 0.0
    %136 = vmatprep.subr.mxu0 0.0
    %137 = vmatpush1.msra.mxu0 0.0
    %138 = vmatprep.subr.mxu0 0.0
    %139 = vmatpush1.msra.mxu0 0.0
    %140 = vmatprep.subr.mxu0 0.0
    %141 = vmatpush1.msra.mxu0 0.0
    %142 = vmatprep.subr.mxu0 0.0
    %143 = vmatpush1.msra.mxu0 0.0
    %144 = vmatprep.subr.mxu0 0.0
    %145 = vmatpush1.msra.mxu0 0.0
    %146 = vmatprep.subr.mxu0 0.0
    %147 = vmatpush1.msra.mxu0 0.0
    %148 = vmatprep.subr.mxu0 0.0
    %149 = vmatpush1.msra.mxu0 0.0
    %150 = vmatprep.subr.mxu0 0.0
    %151 = vmatpush1.msra.mxu0 0.0
    %152 = vmatprep.subr.mxu0 0.0
    %153 = vmatpush1.msra.mxu0 0.0
    %154 = vmatprep.subr.mxu0 0.0
    %155 = vmatpush1.msra.mxu0 0.0
    %156 = vmatprep.subr.mxu0 0.0
    %157 = vmatpush1.msra.mxu0 0.0
    %158 = vmatprep.subr.mxu0 0.0
    %159 = vmatpush1.msra.mxu0 %v122
    %160 = vmatprep.subr.mxu0 0.0
    %161 = vmatpush1.msra.mxu0 %v121
    %162 = vmatprep.subr.mxu0 0.0
    %163 = vmatpush1.msra.mxu0 %v120
    %164 = vmatprep.subr.mxu0 0.0
    %165 = vmatpush1.msra.mxu0 %v119
    %166 = vmatprep.subr.mxu0 0.0
    %167 = vmatpush2.msra.mxu0 0.0
    %168 = vmatprep.subr.mxu0 0.0
    %169 = vmatpush2.msra.mxu0 0.0
    %170 = vmatprep.subr.mxu0 0.0
    %171 = vmatpush2.msra.mxu0 0.0
    %172 = vmatprep.subr.mxu0 0.0
    %173 = vmatpush2.msra.mxu0 0.0
    %174 = vmatprep.subr.mxu0 0.0
    %175 = vmatpush2.msra.mxu0 0.0
    %176 = vmatprep.subr.mxu0 0.0
    %177 = vmatpush2.msra.mxu0 0.0
    %178 = vmatprep.subr.mxu0 0.0
    %179 = vmatpush2.msra.mxu0 0.0
    %180 = vmatprep.subr.mxu0 0.0
    %181 = vmatpush2.msra.mxu0 0.0
    %182 = vmatprep.subr.mxu0 0.0
    %183 = vmatpush2.msra.mxu0 0.0
    %184 = vmatprep.subr.mxu0 0.0
    %185 = vmatpush2.msra.mxu0 0.0
    %186 = vmatprep.subr.mxu0 0.0
    %187 = vmatpush2.msra.mxu0 0.0
    %188 = vmatprep.subr.mxu0 0.0
    %189 = vmatpush2.msra.mxu0 0.0
    %190 = vmatprep.subr.mxu0 0.0
    %191 = vmatpush2.msra.mxu0 0.0
    %192 = vmatprep.subr.mxu0 0.0
    %193 = vmatpush2.msra.mxu0 0.0
    %194 = vmatprep.subr.mxu0 0.0
    %195 = vmatpush2.msra.mxu0 0.0
    %196 = vmatprep.subr.mxu0 0.0
    %197 = vmatpush2.msra.mxu0 0.0
    %198 = vmatprep.mubr.f32.mxu0 0.0
    %199 = vmatmul.mubr.f32.gmra.mxu0 %v132
    %v200 = vpop.f32.mrf.mxu0
    %v201 = vadd.f32 %v128, %v200
    %v202 = vpop.f32.mrf.mxu0
    %203 = vdwg.mxu0
    %v204 = vmul.f32 %v201, 0.2
    %v205 = vmax.f32 %v201, %v204
    %v206 = vld [vmem:[%s5] sm:$0xff]
    %v207 = vld [vmem:[%s5 + $0x8] sm:$0xff]
    %v208 = vld [vmem:[%s5 + $0x10] sm:$0xff]
    %v209 = vld [vmem:[%s5 + $0x18] sm:$0xff]
    %v210 = vld [vmem:[%s6] sm:$0x1]
    %v212 = vlaneseq
    %v213 = vshrl.u32 %v212, 7
    %v214 = vsub.s32 0, %v213
    %v215 = vrot.slane %v210, %v214
    %v218 = vsel %vm130, %v205, 0
    %220 = vmatprep.subr.mxu0 0.0
    %221 = vmatpush1.msra.mxu0 0.0
    %222 = vmatprep.subr.mxu0 0.0
    %223 = vmatpush1.msra.mxu0 0.0
    %224 = vmatprep.subr.mxu0 0.0
    %225 = vmatpush1.msra.mxu0 0.0
    %226 = vmatprep.subr.mxu0 0.0
    %227 = vmatpush1.msra.mxu0 0.0
    %228 = vmatprep.subr.mxu0 0.0
    %229 = vmatpush1.msra.mxu0 0.0
    %230 = vmatprep.subr.mxu0 0.0
    %231 = vmatpush1.msra.mxu0 0.0
    %232 = vmatprep.subr.mxu0 0.0
    %233 = vmatpush1.msra.mxu0 0.0
    %234 = vmatprep.subr.mxu0 0.0
    %235 = vmatpush1.msra.mxu0 0.0
    %236 = vmatprep.subr.mxu0 0.0
    %237 = vmatpush1.msra.mxu0 0.0
    %238 = vmatprep.subr.mxu0 0.0
    %239 = vmatpush1.msra.mxu0 0.0
    %240 = vmatprep.subr.mxu0 0.0
    %241 = vmatpush1.msra.mxu0 0.0
    %242 = vmatprep.subr.mxu0 0.0
    %243 = vmatpush1.msra.mxu0 0.0
    %244 = vmatprep.subr.mxu0 0.0
    %245 = vmatpush1.msra.mxu0 %v209
    %246 = vmatprep.subr.mxu0 0.0
    %247 = vmatpush1.msra.mxu0 %v208
    %248 = vmatprep.subr.mxu0 0.0
    %249 = vmatpush1.msra.mxu0 %v207
    %250 = vmatprep.subr.mxu0 0.0
    %251 = vmatpush1.msra.mxu0 %v206
    %252 = vmatprep.subr.mxu0 0.0
    %253 = vmatpush2.msra.mxu0 0.0
    %254 = vmatprep.subr.mxu0 0.0
    %255 = vmatpush2.msra.mxu0 0.0
    %256 = vmatprep.subr.mxu0 0.0
    %257 = vmatpush2.msra.mxu0 0.0
    %258 = vmatprep.subr.mxu0 0.0
    %259 = vmatpush2.msra.mxu0 0.0
    %260 = vmatprep.subr.mxu0 0.0
    %261 = vmatpush2.msra.mxu0 0.0
    %262 = vmatprep.subr.mxu0 0.0
    %263 = vmatpush2.msra.mxu0 0.0
    %264 = vmatprep.subr.mxu0 0.0
    %265 = vmatpush2.msra.mxu0 0.0
    %266 = vmatprep.subr.mxu0 0.0
    %267 = vmatpush2.msra.mxu0 0.0
    %268 = vmatprep.subr.mxu0 0.0
    %269 = vmatpush2.msra.mxu0 0.0
    %270 = vmatprep.subr.mxu0 0.0
    %271 = vmatpush2.msra.mxu0 0.0
    %272 = vmatprep.subr.mxu0 0.0
    %273 = vmatpush2.msra.mxu0 0.0
    %274 = vmatprep.subr.mxu0 0.0
    %275 = vmatpush2.msra.mxu0 0.0
    %276 = vmatprep.subr.mxu0 0.0
    %277 = vmatpush2.msra.mxu0 0.0
    %278 = vmatprep.subr.mxu0 0.0
    %279 = vmatpush2.msra.mxu0 0.0
    %280 = vmatprep.subr.mxu0 0.0
    %281 = vmatpush2.msra.mxu0 0.0
    %282 = vmatprep.subr.mxu0 0.0
    %283 = vmatpush2.msra.mxu0 0.0
    %284 = vmatprep.mubr.f32.mxu0 0.0
    %285 = vmatmul.mubr.f32.gmra.mxu0 %v218
    %v286 = vpop.f32.mrf.mxu0
    %v287 = vadd.f32 %v215, %v286
    %v288 = vpop.f32.mrf.mxu0
    %289 = vdwg.mxu0
    %290 = vst [vmem:[#allocation2] sm:$0x3] %v287
    // Predicated region
    $region30: #{tpu_custom_call.1} parent=1 // pred_check
      _
    $region31: #{tpu_custom_call.1} parent=1 // pred_check_branch
      %292 = sbr.rel (0) target = $region33
    $region32: #{tpu_custom_call.1} parent=1 // pred_region
      %s294 = ssub.s32 32, 32
      %295 = vsyncadd [#allocation3], %s294
      %s297 = sshll.u32 [#allocation2], 4
      %s298 = int_to_ptr.vmem [resolvable:$true] %s297
      %300 = dma.vmem_to_hbm [thread:$0]  %s298, 32, %s7, [#allocation3]
    $region33: #{tpu_custom_call.1} parent=1 // pred_fallthru
      _
    // Predicated region
    $region34: #{tpu_custom_call.1} parent=1 // pred_check
      _
    $region35: #{tpu_custom_call.1} parent=1 // pred_check_branch
      %302 = sbr.rel (0) target = $region37
    $region36: #{tpu_custom_call.1} parent=1 // pred_region
      %303 = dma.done [#allocation3], 32
    $region37: #{tpu_custom_call.1} parent=1 // pred_fallthru
      _
    %304 = vsyncpa [#allocation3], 1

</llo_original>
